<compile_context>
chip_gen: v6e
topology: v6e:2x2x1
jax: 0.10.0
libtpu: 0.0.40
codegen_flags: <defaults>
</compile_context>

<pallas_src>
import functools

import jax
import jax.numpy as jnp
from jax import lax
from jax.experimental import pallas as pl
from jax.experimental.pallas import tpu as pltpu


# ---------------------------------------------------------------------------
# Fused kernel: one grid step == one batch element, all heads handled inside.
#   qkv   = x @ W_qkv                                   (MXU, f32 accumulate)
#   per h: s = (q*scale) @ k^T ; p = softmax(s) ; o_h = p @ v
#   out   = concat_h(o_h) @ W_out + b_out               (lane-dense store)
# ---------------------------------------------------------------------------
def _fused_attention_kernel(x_ref, wqkv_ref, wout_ref, bout_ref, o_ref, *,
                            heads, dim_head, scale):
    x = x_ref[0]                                   # (N, C)
    inner = heads * dim_head

    # QKV projection for the whole batch element.
    qkv = jnp.dot(x, wqkv_ref[...],
                  preferred_element_type=jnp.float32)        # (N, 3*inner)

    head_outs = []
    for h in range(heads):                         # static unroll (heads small)
        lo = h * dim_head
        # Fold the softmax scale into q: touches N*D elements, not N*N scores.
        q = qkv[:, lo:lo + dim_head] * scale                     # (N, D)
        k = qkv[:, inner + lo:inner + lo + dim_head]             # (N, D)
        v = qkv[:, 2 * inner + lo:2 * inner + lo + dim_head]     # (N, D)

        # Contract last dims directly — no explicit k.T / XLU transpose pass.
        s = lax.dot_general(q, k, (((1,), (1,)), ((), ())),
                            preferred_element_type=jnp.float32)  # (N, N)
        s = s - jnp.max(s, axis=-1, keepdims=True)
        p = jnp.exp(s)
        # approx reciprocal -> EUP slot, frees VALU bundle slots.
        p = p * pl.reciprocal(jnp.sum(p, axis=-1, keepdims=True), approx=True)

        head_outs.append(jnp.dot(p, v, preferred_element_type=jnp.float32))

    # 'b h n d -> b n (h d)' done in-VMEM: lane-dense (N, inner) tile.
    attn = jnp.concatenate(head_outs, axis=-1)                   # (N, inner)

    # Output projection with fused bias add; single lane-dense (N, C) store.
    out = jnp.dot(attn, wout_ref[...], preferred_element_type=jnp.float32)
    out = out + bout_ref[...]                                    # (1, C) bcast
    o_ref[0] = out.astype(o_ref.dtype)


def attention_forward(x, w_qkv, w_out, b_out, heads, dim_head):
    b, n, c = x.shape
    inner = heads * dim_head
    scale = dim_head ** (-0.5)
    b_out2d = b_out.reshape(1, c)

    kernel = functools.partial(
        _fused_attention_kernel, heads=heads, dim_head=dim_head, scale=scale)

    return pl.pallas_call(
        kernel,
        out_shape=jax.ShapeDtypeStruct((b, n, c), x.dtype),
        grid_spec=pltpu.PrefetchScalarGridSpec(
            num_scalar_prefetch=0,
            grid=(b,),
            in_specs=[
                # per-batch activation tile
                pl.BlockSpec((1, n, c), lambda i: (i, 0, 0)),
                # weights/bias: same block every step -> stay VMEM-resident
                pl.BlockSpec((c, 3 * inner), lambda i: (0, 0)),
                pl.BlockSpec((inner, c), lambda i: (0, 0)),
                pl.BlockSpec((1, c), lambda i: (0, 0)),
            ],
            out_specs=pl.BlockSpec((1, n, c), lambda i: (i, 0, 0)),
        ),
        compiler_params=pltpu.CompilerParams(
            # batch axis is independent -> shards across the 2 TCs on v7x.
            dimension_semantics=("parallel",),
        ),
    )(x, w_qkv, w_out, b_out2d)


# ---------------------------------------------------------------------------
# Pure-JAX reference (mirrors the PyTorch module semantics).
# ---------------------------------------------------------------------------
def reference_forward(x, w_qkv, w_out, b_out, heads, dim_head):
    b, n, c = x.shape
    inner = heads * dim_head
    scale = dim_head ** (-0.5)
    qkv = x @ w_qkv
    q, k, v = jnp.split(qkv, 3, axis=-1)

    def to_heads(t):
        return t.reshape(b, n, heads, dim_head).transpose(0, 2, 1, 3)

    q, k, v = map(to_heads, (q, k, v))
    dots = jnp.einsum("bhid,bhjd->bhij", q, k) * scale
    attn = jax.nn.softmax(dots, axis=-1)
    out = jnp.einsum("bhij,bhjd->bhid", attn, v)
    out = out.transpose(0, 2, 1, 3).reshape(b, n, inner)
    return out @ w_out + b_out


if __name__ == "__main__":
    # Small shapes consistent with the module: dim=32, heads=4, dim_head=8.
    B, N, DIM = 2, 16, 32
    HEADS, DIM_HEAD = 4, 8
    INNER = HEADS * DIM_HEAD

    key = jax.random.PRNGKey(0)
    kx, kq, ko, kb = jax.random.split(key, 4)

    x = jax.random.normal(kx, (B, N, DIM), dtype=jnp.float32)
    # Linear weights stored already transposed: (in_features, out_features).
    w_qkv = jax.random.normal(kq, (DIM, 3 * INNER), dtype=jnp.float32) * 0.05
    w_out = jax.random.normal(ko, (INNER, DIM), dtype=jnp.float32) * 0.05
    b_out = jax.random.normal(kb, (DIM,), dtype=jnp.float32) * 0.05

    y = attention_forward(x, w_qkv, w_out, b_out, HEADS, DIM_HEAD)
    y = jax.block_until_ready(y)

    y_ref = reference_forward(x, w_qkv, w_out, b_out, HEADS, DIM_HEAD)
    assert y.shape == (B, N, DIM)
    # Tolerance slightly loosened vs. exact softmax because of the EUP
    # approximate reciprocal in the kernel's softmax normalization.
    assert jnp.allclose(y, y_ref, atol=2e-3, rtol=2e-3), "mismatch vs reference"

    print("KERNEL_OK")
</pallas_src>

<mosaic_0001>
module attributes {stable_mosaic.version = 11 : i64} {
  func.func @_fused_attention_kernel(%arg0: i32, %arg1: memref<1x16x32xf32, #tpu.memory_space<vmem>>, %arg2: memref<32x96xf32, #tpu.memory_space<vmem>>, %arg3: memref<32x32xf32, #tpu.memory_space<vmem>>, %arg4: memref<1x32xf32, #tpu.memory_space<vmem>>, %arg5: memref<1x16x32xf32, #tpu.memory_space<vmem>>) attributes {dimension_semantics = [#tpu.dimension_semantics<parallel>], iteration_bounds = array<i64: 2>, scalar_prefetch = 0 : i64, scratch_operands = 0 : i64, tpu.core_type = #tpu.core_type<tc>, window_params = [{transform_indices = @transform_0, window_bounds = array<i64: 1, 16, 32>}, {pipeline_mode = #tpu.pipeline_mode<synchronous>, transform_indices = @transform_1, window_bounds = array<i64: 32, 96>}, {pipeline_mode = #tpu.pipeline_mode<synchronous>, transform_indices = @transform_2, window_bounds = array<i64: 32, 32>}, {pipeline_mode = #tpu.pipeline_mode<synchronous>, transform_indices = @transform_3, window_bounds = array<i64: 1, 32>}, {transform_indices = @transform_4, window_bounds = array<i64: 1, 16, 32>}]} {
    %c0 = arith.constant 0 : index
    %c0_0 = arith.constant 0 : index
    %c0_1 = arith.constant 0 : index
    %0 = vector.load %arg1[%c0, %c0_0, %c0_1] : memref<1x16x32xf32, #tpu.memory_space<vmem>>, vector<1x16x32xf32>
    %1 = vector.shape_cast %0 : vector<1x16x32xf32> to vector<16x32xf32>
    %c0_2 = arith.constant 0 : index
    %c0_3 = arith.constant 0 : index
    %2 = vector.load %arg2[%c0_2, %c0_3] : memref<32x96xf32, #tpu.memory_space<vmem>>, vector<32x96xf32>
    %cst = arith.constant dense<0.000000e+00> : vector<16x96xf32>
    %3 = tpu.matmul %1, %2, %cst {dimension_numbers = #tpu.dot_dimension_numbers<[1], [0], [0], [1], [0, 0, 1, 1], [], []>} : vector<16x32xf32>, vector<32x96xf32>, vector<16x96xf32> -> vector<16x96xf32>
    %4 = vector.extract_strided_slice %3 {offsets = [0, 0], sizes = [16, 8], strides = [1, 1]} : vector<16x96xf32> to vector<16x8xf32>
    %cst_4 = arith.constant 0.353553385 : f32
    %5 = vector.broadcast %cst_4 : f32 to vector<16x8xf32>
    %6 = arith.mulf %4, %5 : vector<16x8xf32>
    %7 = vector.extract_strided_slice %3 {offsets = [0, 32], sizes = [16, 8], strides = [1, 1]} : vector<16x96xf32> to vector<16x8xf32>
    %8 = vector.extract_strided_slice %3 {offsets = [0, 64], sizes = [16, 8], strides = [1, 1]} : vector<16x96xf32> to vector<16x8xf32>
    %cst_5 = arith.constant dense<0.000000e+00> : vector<16x16xf32>
    %9 = tpu.matmul %6, %7, %cst_5 {dimension_numbers = #tpu.dot_dimension_numbers<[1], [1], [0], [0], [0, 0, 1, 0], [], []>} : vector<16x8xf32>, vector<16x8xf32>, vector<16x16xf32> -> vector<16x16xf32>
    %cst_6 = arith.constant dense<0xFF800000> : vector<16xf32>
    %10 = vector.multi_reduction <maximumf>, %9, %cst_6 [1] : vector<16x16xf32> to vector<16xf32>
    %11 = vector.shape_cast %10 : vector<16xf32> to vector<16x1xf32>
    %12 = vector.broadcast %11 : vector<16x1xf32> to vector<16x16xf32>
    %13 = arith.subf %9, %12 : vector<16x16xf32>
    %14 = math.exp %13 : vector<16x16xf32>
    %cst_7 = arith.constant dense<0.000000e+00> : vector<16xf32>
    %15 = vector.multi_reduction <add>, %14, %cst_7 [1] : vector<16x16xf32> to vector<16xf32>
    %16 = vector.shape_cast %15 : vector<16xf32> to vector<16x1xf32>
    %17 = tpu.reciprocal %16 {approx = true} : vector<16x1xf32> -> vector<16x1xf32>
    %18 = vector.broadcast %17 : vector<16x1xf32> to vector<16x16xf32>
    %19 = arith.mulf %14, %18 : vector<16x16xf32>
    %cst_8 = arith.constant dense<0.000000e+00> : vector<16x8xf32>
    %20 = tpu.matmul %19, %8, %cst_8 {dimension_numbers = #tpu.dot_dimension_numbers<[1], [0], [0], [1], [0, 0, 1, 1], [], []>} : vector<16x16xf32>, vector<16x8xf32>, vector<16x8xf32> -> vector<16x8xf32>
    %21 = vector.extract_strided_slice %3 {offsets = [0, 8], sizes = [16, 8], strides = [1, 1]} : vector<16x96xf32> to vector<16x8xf32>
    %cst_9 = arith.constant 0.353553385 : f32
    %22 = vector.broadcast %cst_9 : f32 to vector<16x8xf32>
    %23 = arith.mulf %21, %22 : vector<16x8xf32>
    %24 = vector.extract_strided_slice %3 {offsets = [0, 40], sizes = [16, 8], strides = [1, 1]} : vector<16x96xf32> to vector<16x8xf32>
    %25 = vector.extract_strided_slice %3 {offsets = [0, 72], sizes = [16, 8], strides = [1, 1]} : vector<16x96xf32> to vector<16x8xf32>
    %cst_10 = arith.constant dense<0.000000e+00> : vector<16x16xf32>
    %26 = tpu.matmul %23, %24, %cst_10 {dimension_numbers = #tpu.dot_dimension_numbers<[1], [1], [0], [0], [0, 0, 1, 0], [], []>} : vector<16x8xf32>, vector<16x8xf32>, vector<16x16xf32> -> vector<16x16xf32>
    %cst_11 = arith.constant dense<0xFF800000> : vector<16xf32>
    %27 = vector.multi_reduction <maximumf>, %26, %cst_11 [1] : vector<16x16xf32> to vector<16xf32>
    %28 = vector.shape_cast %27 : vector<16xf32> to vector<16x1xf32>
    %29 = vector.broadcast %28 : vector<16x1xf32> to vector<16x16xf32>
    %30 = arith.subf %26, %29 : vector<16x16xf32>
    %31 = math.exp %30 : vector<16x16xf32>
    %cst_12 = arith.constant dense<0.000000e+00> : vector<16xf32>
    %32 = vector.multi_reduction <add>, %31, %cst_12 [1] : vector<16x16xf32> to vector<16xf32>
    %33 = vector.shape_cast %32 : vector<16xf32> to vector<16x1xf32>
    %34 = tpu.reciprocal %33 {approx = true} : vector<16x1xf32> -> vector<16x1xf32>
    %35 = vector.broadcast %34 : vector<16x1xf32> to vector<16x16xf32>
    %36 = arith.mulf %31, %35 : vector<16x16xf32>
    %cst_13 = arith.constant dense<0.000000e+00> : vector<16x8xf32>
    %37 = tpu.matmul %36, %25, %cst_13 {dimension_numbers = #tpu.dot_dimension_numbers<[1], [0], [0], [1], [0, 0, 1, 1], [], []>} : vector<16x16xf32>, vector<16x8xf32>, vector<16x8xf32> -> vector<16x8xf32>
    %38 = vector.extract_strided_slice %3 {offsets = [0, 16], sizes = [16, 8], strides = [1, 1]} : vector<16x96xf32> to vector<16x8xf32>
    %cst_14 = arith.constant 0.353553385 : f32
    %39 = vector.broadcast %cst_14 : f32 to vector<16x8xf32>
    %40 = arith.mulf %38, %39 : vector<16x8xf32>
    %41 = vector.extract_strided_slice %3 {offsets = [0, 48], sizes = [16, 8], strides = [1, 1]} : vector<16x96xf32> to vector<16x8xf32>
    %42 = vector.extract_strided_slice %3 {offsets = [0, 80], sizes = [16, 8], strides = [1, 1]} : vector<16x96xf32> to vector<16x8xf32>
    %cst_15 = arith.constant dense<0.000000e+00> : vector<16x16xf32>
    %43 = tpu.matmul %40, %41, %cst_15 {dimension_numbers = #tpu.dot_dimension_numbers<[1], [1], [0], [0], [0, 0, 1, 0], [], []>} : vector<16x8xf32>, vector<16x8xf32>, vector<16x16xf32> -> vector<16x16xf32>
    %cst_16 = arith.constant dense<0xFF800000> : vector<16xf32>
    %44 = vector.multi_reduction <maximumf>, %43, %cst_16 [1] : vector<16x16xf32> to vector<16xf32>
    %45 = vector.shape_cast %44 : vector<16xf32> to vector<16x1xf32>
    %46 = vector.broadcast %45 : vector<16x1xf32> to vector<16x16xf32>
    %47 = arith.subf %43, %46 : vector<16x16xf32>
    %48 = math.exp %47 : vector<16x16xf32>
    %cst_17 = arith.constant dense<0.000000e+00> : vector<16xf32>
    %49 = vector.multi_reduction <add>, %48, %cst_17 [1] : vector<16x16xf32> to vector<16xf32>
    %50 = vector.shape_cast %49 : vector<16xf32> to vector<16x1xf32>
    %51 = tpu.reciprocal %50 {approx = true} : vector<16x1xf32> -> vector<16x1xf32>
    %52 = vector.broadcast %51 : vector<16x1xf32> to vector<16x16xf32>
    %53 = arith.mulf %48, %52 : vector<16x16xf32>
    %cst_18 = arith.constant dense<0.000000e+00> : vector<16x8xf32>
    %54 = tpu.matmul %53, %42, %cst_18 {dimension_numbers = #tpu.dot_dimension_numbers<[1], [0], [0], [1], [0, 0, 1, 1], [], []>} : vector<16x16xf32>, vector<16x8xf32>, vector<16x8xf32> -> vector<16x8xf32>
    %55 = vector.extract_strided_slice %3 {offsets = [0, 24], sizes = [16, 8], strides = [1, 1]} : vector<16x96xf32> to vector<16x8xf32>
    %cst_19 = arith.constant 0.353553385 : f32
    %56 = vector.broadcast %cst_19 : f32 to vector<16x8xf32>
    %57 = arith.mulf %55, %56 : vector<16x8xf32>
    %58 = vector.extract_strided_slice %3 {offsets = [0, 56], sizes = [16, 8], strides = [1, 1]} : vector<16x96xf32> to vector<16x8xf32>
    %59 = vector.extract_strided_slice %3 {offsets = [0, 88], sizes = [16, 8], strides = [1, 1]} : vector<16x96xf32> to vector<16x8xf32>
    %cst_20 = arith.constant dense<0.000000e+00> : vector<16x16xf32>
    %60 = tpu.matmul %57, %58, %cst_20 {dimension_numbers = #tpu.dot_dimension_numbers<[1], [1], [0], [0], [0, 0, 1, 0], [], []>} : vector<16x8xf32>, vector<16x8xf32>, vector<16x16xf32> -> vector<16x16xf32>
    %cst_21 = arith.constant dense<0xFF800000> : vector<16xf32>
    %61 = vector.multi_reduction <maximumf>, %60, %cst_21 [1] : vector<16x16xf32> to vector<16xf32>
    %62 = vector.shape_cast %61 : vector<16xf32> to vector<16x1xf32>
    %63 = vector.broadcast %62 : vector<16x1xf32> to vector<16x16xf32>
    %64 = arith.subf %60, %63 : vector<16x16xf32>
    %65 = math.exp %64 : vector<16x16xf32>
    %cst_22 = arith.constant dense<0.000000e+00> : vector<16xf32>
    %66 = vector.multi_reduction <add>, %65, %cst_22 [1] : vector<16x16xf32> to vector<16xf32>
    %67 = vector.shape_cast %66 : vector<16xf32> to vector<16x1xf32>
    %68 = tpu.reciprocal %67 {approx = true} : vector<16x1xf32> -> vector<16x1xf32>
    %69 = vector.broadcast %68 : vector<16x1xf32> to vector<16x16xf32>
    %70 = arith.mulf %65, %69 : vector<16x16xf32>
    %cst_23 = arith.constant dense<0.000000e+00> : vector<16x8xf32>
    %71 = tpu.matmul %70, %59, %cst_23 {dimension_numbers = #tpu.dot_dimension_numbers<[1], [0], [0], [1], [0, 0, 1, 1], [], []>} : vector<16x16xf32>, vector<16x8xf32>, vector<16x8xf32> -> vector<16x8xf32>
    %72 = tpu.concatenate %20, %37, %54, %71 in 1 : vector<16x8xf32>, vector<16x8xf32>, vector<16x8xf32>, vector<16x8xf32> -> vector<16x32xf32>
    %c0_24 = arith.constant 0 : index
    %c0_25 = arith.constant 0 : index
    %73 = vector.load %arg3[%c0_24, %c0_25] : memref<32x32xf32, #tpu.memory_space<vmem>>, vector<32x32xf32>
    %cst_26 = arith.constant dense<0.000000e+00> : vector<16x32xf32>
    %74 = tpu.matmul %72, %73, %cst_26 {dimension_numbers = #tpu.dot_dimension_numbers<[1], [0], [0], [1], [0, 0, 1, 1], [], []>} : vector<16x32xf32>, vector<32x32xf32>, vector<16x32xf32> -> vector<16x32xf32>
    %c0_27 = arith.constant 0 : index
    %c0_28 = arith.constant 0 : index
    %75 = vector.load %arg4[%c0_27, %c0_28] : memref<1x32xf32, #tpu.memory_space<vmem>>, vector<1x32xf32>
    %76 = vector.broadcast %75 : vector<1x32xf32> to vector<16x32xf32>
    %77 = arith.addf %74, %76 : vector<16x32xf32>
    %c0_29 = arith.constant 0 : index
    %c0_30 = arith.constant 0 : index
    %c0_31 = arith.constant 0 : index
    %78 = vector.load %arg5[%c0_29, %c0_30, %c0_31] : memref<1x16x32xf32, #tpu.memory_space<vmem>>, vector<1x16x32xf32>
    %79 = vector.shape_cast %78 : vector<1x16x32xf32> to vector<16x32xf32>
    %80 = vector.shape_cast %77 : vector<16x32xf32> to vector<1x16x32xf32>
    tpu.vector_store %arg5[%c0_29, %c0_30, %c0_31], %80 {strides = array<i32>} : memref<1x16x32xf32, #tpu.memory_space<vmem>>, vector<1x16x32xf32>,
    return
  }
  func.func @transform_0(%arg0: i32) -> (i32, i32, i32) {
    %c0_i32 = arith.constant 0 : i32
    %c0_i32_0 = arith.constant 0 : i32
    %c0_i32_1 = arith.constant 0 : i32
    return %arg0, %c0_i32, %c0_i32_0 : i32, i32, i32
  }
  func.func @transform_1(%arg0: i32) -> (i32, i32) {
    %c0_i32 = arith.constant 0 : i32
    %c0_i32_0 = arith.constant 0 : i32
    %c0_i32_1 = arith.constant 0 : i32
    return %c0_i32, %c0_i32_0 : i32, i32
  }
  func.func @transform_2(%arg0: i32) -> (i32, i32) {
    %c0_i32 = arith.constant 0 : i32
    %c0_i32_0 = arith.constant 0 : i32
    %c0_i32_1 = arith.constant 0 : i32
    return %c0_i32, %c0_i32_0 : i32, i32
  }
  func.func @transform_3(%arg0: i32) -> (i32, i32) {
    %c0_i32 = arith.constant 0 : i32
    %c0_i32_0 = arith.constant 0 : i32
    %c0_i32_1 = arith.constant 0 : i32
    return %c0_i32, %c0_i32_0 : i32, i32
  }
  func.func @transform_4(%arg0: i32) -> (i32, i32, i32) {
    %c0_i32 = arith.constant 0 : i32
    %c0_i32_0 = arith.constant 0 : i32
    %c0_i32_1 = arith.constant 0 : i32
    return %arg0, %c0_i32, %c0_i32_0 : i32, i32, i32
  }
}

</mosaic_0001>

<llo_original>
// kernel: tpu_custom_call.1
$region0: #{tpu_custom_call.1}
  #allocation0 [shape = 'u32[]', space=smem, size = 0x4, offset = 0x4, fixed_abs, tag = 'smem constant byte address 0x4 - core index']
  #allocation1 [shape = 'u32[144,128]{1,0:T(1,128)}', space=vmem, size = 0x12000, scoped, tag = 'internal scratch']
  %s0 = inlined_call_operand.hbm [shape: f32[2,16,32], index: 0, kind: input, shape index: {}]
  %s1 = inlined_call_operand.hbm [shape: f32[32,96], index: 1, kind: input, shape index: {}]
  %s2 = inlined_call_operand.hbm [shape: f32[32,32], index: 2, kind: input, shape index: {}]
  %s3 = inlined_call_operand.vmem [shape: f32[1,32], index: 3, kind: input, shape index: {}]
  %s4 = inlined_call_operand.hbm [shape: f32[2,16,32], index: 4, kind: output, shape index: {}]
  %s5 = sld [smem:[#allocation0]]
  $region61: #{tpu_custom_call.1} parent=0
    _
  %s7 = ssub.s32 1, %s5
  %s8 = scalar_select 0, %s7, %s5
  $region1: #{tpu_custom_call.1} parent=0
    #allocation2 [shape = 'u8[16384]{0}', space=vmem, size = 0x4000, scoped, tag = 'input window, operand 0']
    #allocation3 [shape = 's32[2]{0}', space=sflag, size = 0x8, scoped, tag = 'scoped memory for tpu_custom_call.1']
    #allocation4 [shape = 's32[2]{0}', space=sflag, size = 0x8, scoped, tag = 'scoped memory for tpu_custom_call.1']
    #allocation5 [shape = 'u8[16384]{0}', space=vmem, size = 0x4000, scoped, tag = 'input window, operand 1, single buffered']
    #allocation6 [shape = 's32[1]{0}', space=sflag, size = 0x4, scoped, tag = 'scoped memory for tpu_custom_call.1']
    #allocation7 [shape = 'u8[16384]{0}', space=vmem, size = 0x4000, scoped, tag = 'input window, operand 2, single buffered']
    #allocation8 [shape = 'u8[16384]{0}', space=vmem, size = 0x4000, scoped, tag = 'output window, operand 0']
    %9 = vsyncpa [#allocation3], 0
    %s10 = scalar_lea.sflag [#allocation3], 1
    %11 = vsyncpa %s10, 0
    %12 = vsyncpa [#allocation6], 0
    %13 = vsyncpa [#allocation4], 0
    %s14 = scalar_lea.sflag [#allocation4], 1
    %15 = vsyncpa %s14, 0
    loop: start=0, step=1, limit=4
    $region2: #{tpu_custom_call.1} parent=1 // loop_pre_header
      _
    $region3: #{tpu_custom_call.1} parent=1 // loop_header
      %s17 = sphi 0, %s21
      %p18 = scmp.ge.s32.totalorder %s17, 4
      %s27 = sphi 0, %s29
      %s30 = sphi 0, %s27
      %s31 = sphi 0, %s30
      %s47 = sphi 0, %s31
      %s51 = sphi 0, %s51
      %s53 = sphi 0, %s51
      %s54 = sphi 0, %s53
      %s68 = sphi 0, %s54
      %s72 = sphi 0, %s72
      %s74 = sphi 0, %s72
      %s75 = sphi 0, %s74
      %s89 = sphi 0, %s75
      %s93 = sphi 0, %s93
      %s95 = sphi 0, %s93
      %s96 = sphi 0, %s95
      %s110 = sphi 0, %s96
      %s116 = sphi 0, %s118
      %s119 = sphi 0, %s116
      %s120 = sphi 0, %s119
      %s136 = sphi 0, %s120
    $region4: #{tpu_custom_call.1} parent=1 // loop_header_branch
      %20 = sbr.rel (%p18) target = $region8
    $region5: #{tpu_custom_call.1} parent=1 // loop_body
      %s22 = ssub.s32 %s17, 1
      %s23 = ssub.s32 %s17, 2
      %s24 = sadd.s32 %s17, 1
      %s25 = ssub.s32 %s17, %s24
      %p26 = scmp.eq.s32.totalorder %s25, 0
      %s28 = sadd.s32 %s27, 1
      %s29 = scalar_select %p26, %s27, %s28
      %p32 = pneg %p26
      %p33 = scmp.eq.s32.totalorder %s17, 1
      %p34 = por %p32, %p33
      %p35 = scmp.ne.s32.totalorder %s27, %s30
      %p36 = scmp.eq.s32.totalorder %s17, 0
      %p37 = por %p35, %p36
      %p38 = scmp.ne.s32.totalorder %s27, %s30
      %p39 = scmp.eq.s32.totalorder %s22, 1
      %p40 = por %p38, %p39
      %p41 = scmp.ne.s32.totalorder %s30, %s31
      %p42 = scmp.eq.s32.totalorder %s22, 0
      %p43 = por %p41, %p42
      %p44 = scmp.ne.s32.totalorder %s30, %s31
      %p45 = scmp.eq.s32.totalorder %s23, 1
      %p46 = por %p44, %p45
      %p48 = scmp.ne.s32.totalorder %s31, %s47
      %p49 = scmp.eq.s32.totalorder %s23, 0
      %p50 = por %p48, %p49
      %s52 = sadd.s32 %s51, 1
      %p55 = scmp.eq.s32.totalorder %s17, 1
      %p56 = scmp.ne.s32.totalorder %s51, %s53
      %p57 = scmp.eq.s32.totalorder %s17, 0
      %p58 = por %p56, %p57
      %p59 = scmp.ne.s32.totalorder %s51, %s53
      %p60 = scmp.eq.s32.totalorder %s22, 1
      %p61 = por %p59, %p60
      %p62 = scmp.ne.s32.totalorder %s53, %s54
      %p63 = scmp.eq.s32.totalorder %s22, 0
      %p64 = por %p62, %p63
      %p65 = scmp.ne.s32.totalorder %s53, %s54
      %p66 = scmp.eq.s32.totalorder %s23, 1
      %p67 = por %p65, %p66
      %p69 = scmp.ne.s32.totalorder %s54, %s68
      %p70 = scmp.eq.s32.totalorder %s23, 0
      %p71 = por %p69, %p70
      %s73 = sadd.s32 %s72, 1
      %p76 = scmp.eq.s32.totalorder %s17, 1
      %p77 = scmp.ne.s32.totalorder %s72, %s74
      %p78 = scmp.eq.s32.totalorder %s17, 0
      %p79 = por %p77, %p78
      %p80 = scmp.ne.s32.totalorder %s72, %s74
      %p81 = scmp.eq.s32.totalorder %s22, 1
      %p82 = por %p80, %p81
      %p83 = scmp.ne.s32.totalorder %s74, %s75
      %p84 = scmp.eq.s32.totalorder %s22, 0
      %p85 = por %p83, %p84
      %p86 = scmp.ne.s32.totalorder %s74, %s75
      %p87 = scmp.eq.s32.totalorder %s23, 1
      %p88 = por %p86, %p87
      %p90 = scmp.ne.s32.totalorder %s75, %s89
      %p91 = scmp.eq.s32.totalorder %s23, 0
      %p92 = por %p90, %p91
      %s94 = sadd.s32 %s93, 1
      %p97 = scmp.eq.s32.totalorder %s17, 1
      %p98 = scmp.ne.s32.totalorder %s93, %s95
      %p99 = scmp.eq.s32.totalorder %s17, 0
      %p100 = por %p98, %p99
      %p101 = scmp.ne.s32.totalorder %s93, %s95
      %p102 = scmp.eq.s32.totalorder %s22, 1
      %p103 = por %p101, %p102
      %p104 = scmp.ne.s32.totalorder %s95, %s96
      %p105 = scmp.eq.s32.totalorder %s22, 0
      %p106 = por %p104, %p105
      %p107 = scmp.ne.s32.totalorder %s95, %s96
      %p108 = scmp.eq.s32.totalorder %s23, 1
      %p109 = por %p107, %p108
      %p111 = scmp.ne.s32.totalorder %s96, %s110
      %p112 = scmp.eq.s32.totalorder %s23, 0
      %p113 = por %p111, %p112
      %s114 = ssub.s32 %s17, %s24
      %p115 = scmp.eq.s32.totalorder %s114, 0
      %s117 = sadd.s32 %s116, 1
      %s118 = scalar_select %p115, %s116, %s117
      %p121 = pneg %p115
      %p122 = scmp.eq.s32.totalorder %s17, 1
      %p123 = por %p121, %p122
      %p124 = scmp.ne.s32.totalorder %s116, %s119
      %p125 = scmp.eq.s32.totalorder %s17, 0
      %p126 = por %p124, %p125
      %p127 = scmp.ne.s32.totalorder %s116, %s119
      %p128 = scmp.eq.s32.totalorder %s22, 1
      %p129 = por %p127, %p128
      %p130 = scmp.ne.s32.totalorder %s119, %s120
      %p131 = scmp.eq.s32.totalorder %s22, 0
      %p132 = por %p130, %p131
      %p133 = scmp.ne.s32.totalorder %s119, %s120
      %p134 = scmp.eq.s32.totalorder %s23, 1
      %p135 = por %p133, %p134
      %p137 = scmp.ne.s32.totalorder %s120, %s136
      %p138 = scmp.eq.s32.totalorder %s23, 0
      %p139 = por %p137, %p138
      %p140 = scmp.le.s32.totalorder 1, %s17
      %p141 = scmp.lt.s32.totalorder %s17, 3
      %p142 = pnand %p140, %p141
      %p143 = pneg %p142
      // Predicated region
      $region9: #{tpu_custom_call.1} parent=5 // pred_check
        _
      $region10: #{tpu_custom_call.1} parent=5 // pred_check_branch
        %145 = sbr.rel (%p142) target = $region12
      $region11: #{tpu_custom_call.1} parent=5 // pred_region
        %s146 = ssub.s32 %s17, 1
        // Predicated region
        $region13: #{tpu_custom_call.1} parent=11 // pred_check
          %p147 = pneg %p64
        $region14: #{tpu_custom_call.1} parent=11 // pred_check_branch
          %149 = sbr.rel (%p147) target = $region16
        $region15: #{tpu_custom_call.1} parent=11 // pred_region
          %s151 = ssub.s32 512, 512
          %152 = vsyncadd [#allocation6], %s151
          %s153 = sshll.u32 [#allocation5], 4
          %s154 = int_to_ptr.vmem [resolvable:$true] %s153
          %159 = dma.hbm_to_vmem [thread:$0]  %s1, 512, %s154, [#allocation6], 128, 128, 8
        $region16: #{tpu_custom_call.1} parent=11 // pred_fallthru
          _
        // Predicated region
        $region17: #{tpu_custom_call.1} parent=11 // pred_check
          %p160 = pneg %p85
        $region18: #{tpu_custom_call.1} parent=11 // pred_check_branch
          %162 = sbr.rel (%p160) target = $region20
        $region19: #{tpu_custom_call.1} parent=11 // pred_region
          %s164 = ssub.s32 512, 512
          %165 = vsyncadd [#allocation6], %s164
          %s166 = sshll.u32 [#allocation7], 4
          %s167 = int_to_ptr.vmem [resolvable:$true] %s166
          %172 = dma.hbm_to_vmem [thread:$0]  %s2, 512, %s167, [#allocation6], 128, 128, 8
        $region20: #{tpu_custom_call.1} parent=11 // pred_fallthru
          _
        // Predicated region
        $region21: #{tpu_custom_call.1} parent=11 // pred_check
          %p173 = pneg %p106
        $region22: #{tpu_custom_call.1} parent=11 // pred_check_branch
          %175 = sbr.rel (%p173) target = $region24
        $region23: #{tpu_custom_call.1} parent=11 // pred_region
          _
        $region24: #{tpu_custom_call.1} parent=11 // pred_fallthru
          _
      $region12: #{tpu_custom_call.1} parent=5 // pred_fallthru
        _
      %p176 = scmp.lt.s32.totalorder %s17, 2
      // Predicated region
      $region25: #{tpu_custom_call.1} parent=5 // pred_check
        %p177 = pneg %p176
      $region26: #{tpu_custom_call.1} parent=5 // pred_check_branch
        %179 = sbr.rel (%p177) target = $region28
      $region27: #{tpu_custom_call.1} parent=5 // pred_region
        // Predicated region
        $region29: #{tpu_custom_call.1} parent=27 // pred_check
          %p180 = pneg %p37
        $region30: #{tpu_custom_call.1} parent=27 // pred_check_branch
          %182 = sbr.rel (%p180) target = $region32
        $region31: #{tpu_custom_call.1} parent=27 // pred_region
          %s183 = sand.u32 %s27, 1
          %s184 = scalar_lea.sflag [#allocation3], %s183
          %s185 = sand.u32 %s27, 1
          %s186 = smul.addr %s185, 16
          %s187 = scalar_lea.vmem [#allocation2], %s186
          %s189 = ssub.s32 256, 256
          %190 = vsyncadd %s184, %s189
          %s191 = smul.addr %s17, 2
          %s192 = smul.addr %s191, 128
          %s193 = scalar_lea.hbm %s0, %s192
          %s194 = sshll.u32 %s187, 4
          %s195 = int_to_ptr.vmem [resolvable:$true] %s194
          %200 = dma.hbm_to_vmem [thread:$0]  %s193, 256, %s195, %s184, 128, 128, 8
        $region32: #{tpu_custom_call.1} parent=27 // pred_fallthru
          _
      $region28: #{tpu_custom_call.1} parent=5 // pred_fallthru
        _
      %p201 = scmp.le.s32.totalorder 1, %s17
      %p202 = scmp.lt.s32.totalorder %s17, 3
      %p203 = pnand %p201, %p202
      %p204 = pneg %p203
      // Predicated region
      $region33: #{tpu_custom_call.1} parent=5 // pred_check
        _
      $region34: #{tpu_custom_call.1} parent=5 // pred_check_branch
        %206 = sbr.rel (%p203) target = $region36
      $region35: #{tpu_custom_call.1} parent=5 // pred_region
        %s207 = ssub.s32 %s17, 1
        %s208 = sand.u32 %s30, 1
        %s209 = scalar_lea.sflag [#allocation3], %s208
        %s210 = sand.u32 %s30, 1
        %s211 = smul.addr %s210, 16
        %s212 = scalar_lea.vmem [#allocation2], %s211
        // Predicated region
        $region37: #{tpu_custom_call.1} parent=35 // pred_check
          %p213 = pneg %p43
        $region38: #{tpu_custom_call.1} parent=35 // pred_check_branch
          %215 = sbr.rel (%p213) target = $region40
        $region39: #{tpu_custom_call.1} parent=35 // pred_region
          %216 = dma.done %s209, 256
        $region40: #{tpu_custom_call.1} parent=35 // pred_fallthru
          _
        // Predicated region
        $region41: #{tpu_custom_call.1} parent=35 // pred_check
          %p217 = pneg %p64
        $region42: #{tpu_custom_call.1} parent=35 // pred_check_branch
          %219 = sbr.rel (%p217) target = $region44
        $region43: #{tpu_custom_call.1} parent=35 // pred_region
          %220 = dma.done [#allocation6], 512
        $region44: #{tpu_custom_call.1} parent=35 // pred_fallthru
          _
        // Predicated region
        $region45: #{tpu_custom_call.1} parent=35 // pred_check
          %p221 = pneg %p85
        $region46: #{tpu_custom_call.1} parent=35 // pred_check_branch
          %223 = sbr.rel (%p221) target = $region48
        $region47: #{tpu_custom_call.1} parent=35 // pred_region
          %224 = dma.done [#allocation6], 512
        $region48: #{tpu_custom_call.1} parent=35 // pred_fallthru
          _
        %s225 = sand.u32 %s30, 1
        %s226 = scalar_lea.sflag [#allocation3], %s225
        %s227 = sand.u32 %s30, 1
        %s228 = smul.addr %s227, 16
        %s229 = scalar_lea.vmem [#allocation2], %s228
        %p230 = pneg %p43
        %p231 = pneg %p40
        %p232 = pneg %p64
        %p233 = pneg %p61
        %p234 = pneg %p85
        %p235 = pneg %p82
        %p236 = pneg %p106
        %p237 = pneg %p103
        %p238 = pneg %p132
        %p239 = pneg %p129
        %s240 = sand.u32 %s119, 1
        %s241 = scalar_lea.sflag [#allocation4], %s240
        %s242 = sand.u32 %s119, 1
        %s243 = smul.addr %s242, 16
        %s244 = scalar_lea.vmem [#allocation8], %s243
        %v245 = vld [vmem:[%s212] sm:$0xff]
        %v246 = vld [vmem:[%s212 + $0x8] sm:$0xff]
        %v247 = vld [vmem:[#allocation5] sm:$0xff]
        %v248 = vld [vmem:[#allocation5 + $0x8] sm:$0xff]
        %v249 = vld [vmem:[#allocation5 + $0x10] sm:$0xff]
        %v250 = vld [vmem:[#allocation5 + $0x18] sm:$0xff]
        %vm251 = vcmask 261120
        %v253 = vsel %vm251, %v245, 0
        %v256 = vsel %vm251, %v246, 0
        %258 = vmatprep.subr.mxu0 0.0
        %259 = vmatpush1.msra.mxu0 0.0
        %260 = vmatprep.subr.mxu0 0.0
        %261 = vmatpush1.msra.mxu0 0.0
        %262 = vmatprep.subr.mxu0 0.0
        %263 = vmatpush1.msra.mxu0 0.0
        %264 = vmatprep.subr.mxu0 0.0
        %265 = vmatpush1.msra.mxu0 0.0
        %266 = vmatprep.subr.mxu0 0.0
        %267 = vmatpush1.msra.mxu0 0.0
        %268 = vmatprep.subr.mxu0 0.0
        %269 = vmatpush1.msra.mxu0 0.0
        %270 = vmatprep.subr.mxu0 0.0
        %271 = vmatpush1.msra.mxu0 0.0
        %272 = vmatprep.subr.mxu0 0.0
        %273 = vmatpush1.msra.mxu0 0.0
        %274 = vmatprep.subr.mxu0 0.0
        %275 = vmatpush1.msra.mxu0 0.0
        %276 = vmatprep.subr.mxu0 0.0
        %277 = vmatpush1.msra.mxu0 0.0
        %278 = vmatprep.subr.mxu0 0.0
        %279 = vmatpush1.msra.mxu0 0.0
        %280 = vmatprep.subr.mxu0 0.0
        %281 = vmatpush1.msra.mxu0 0.0
        %282 = vmatprep.subr.mxu0 0.0
        %283 = vmatpush1.msra.mxu0 %v250
        %284 = vmatprep.subr.mxu0 0.0
        %285 = vmatpush1.msra.mxu0 %v249
        %286 = vmatprep.subr.mxu0 0.0
        %287 = vmatpush1.msra.mxu0 %v248
        %288 = vmatprep.subr.mxu0 0.0
        %289 = vmatpush1.msra.mxu0 %v247
        %290 = vmatprep.subr.mxu0 0.0
        %291 = vmatpush2.msra.mxu0 0.0
        %292 = vmatprep.subr.mxu0 0.0
        %293 = vmatpush2.msra.mxu0 0.0
        %294 = vmatprep.subr.mxu0 0.0
        %295 = vmatpush2.msra.mxu0 0.0
        %296 = vmatprep.subr.mxu0 0.0
        %297 = vmatpush2.msra.mxu0 0.0
        %298 = vmatprep.subr.mxu0 0.0
        %299 = vmatpush2.msra.mxu0 0.0
        %300 = vmatprep.subr.mxu0 0.0
        %301 = vmatpush2.msra.mxu0 0.0
        %302 = vmatprep.subr.mxu0 0.0
        %303 = vmatpush2.msra.mxu0 0.0
        %304 = vmatprep.subr.mxu0 0.0
        %305 = vmatpush2.msra.mxu0 0.0
        %306 = vmatprep.subr.mxu0 0.0
        %307 = vmatpush2.msra.mxu0 0.0
        %308 = vmatprep.subr.mxu0 0.0
        %309 = vmatpush2.msra.mxu0 0.0
        %310 = vmatprep.subr.mxu0 0.0
        %311 = vmatpush2.msra.mxu0 0.0
        %312 = vmatprep.subr.mxu0 0.0
        %313 = vmatpush2.msra.mxu0 0.0
        %314 = vmatprep.subr.mxu0 0.0
        %315 = vmatpush2.msra.mxu0 0.0
        %316 = vmatprep.subr.mxu0 0.0
        %317 = vmatpush2.msra.mxu0 0.0
        %318 = vmatprep.subr.mxu0 0.0
        %319 = vmatpush2.msra.mxu0 0.0
        %320 = vmatprep.subr.mxu0 0.0
        %321 = vmatpush2.msra.mxu0 0.0
        %322 = vmatprep.mubr.f32.mxu0 0.0
        %323 = vmatmul.mubr.f32.gmra.mxu0 %v253
        %v324 = vpop.f32.mrf.mxu0
        %v325 = vadd.f32 0.0, %v324
        %v326 = vpop.f32.mrf.mxu0
        %327 = vmatprep.mubr.f32.mxu0 0.0
        %328 = vmatmul.mubr.f32.gmra.mxu0 %v256
        %v329 = vpop.f32.mrf.mxu0
        %v330 = vadd.f32 0.0, %v329
        %v331 = vpop.f32.mrf.mxu0
        %332 = vdwg.mxu0
        %v333 = vmul.f32 %v325, 0.35355338
        %v334 = vmul.f32 %v330, 0.35355338
        %337 = vrot.lane.b32.xlu0 %v325, 96
        %v338 = vpop.permute.xlu0 %337
        %339 = vrot.lane.b32.xlu0 %v330, 96
        %v340 = vpop.permute.xlu0 %339
        %vm341 = vcmask 64512
        %v343 = vsel %vm341, %v333, 0
        %v346 = vsel %vm341, %v334, 0
        %v348 = vsel %vm341, %v338, 0
        %v350 = vsel %vm341, %v340, 0
        %352 = vmatprep.subr.mxu0 0.0
        %353 = vmatpush1.xpose.msra.mxu0 0.0
        %354 = vmatprep.subr.mxu0 0.0
        %355 = vmatpush1.xpose.msra.mxu0 0.0
        %356 = vmatprep.subr.mxu0 0.0
        %357 = vmatpush1.xpose.msra.mxu0 0.0
        %358 = vmatprep.subr.mxu0 0.0
        %359 = vmatpush1.xpose.msra.mxu0 0.0
        %360 = vmatprep.subr.mxu0 0.0
        %361 = vmatpush1.xpose.msra.mxu0 0.0
        %362 = vmatprep.subr.mxu0 0.0
        %363 = vmatpush1.xpose.msra.mxu0 0.0
        %364 = vmatprep.subr.mxu0 0.0
        %365 = vmatpush1.xpose.msra.mxu0 0.0
        %366 = vmatprep.subr.mxu0 0.0
        %367 = vmatpush1.xpose.msra.mxu0 0.0
        %368 = vmatprep.subr.mxu0 0.0
        %369 = vmatpush1.xpose.msra.mxu0 0.0
        %370 = vmatprep.subr.mxu0 0.0
        %371 = vmatpush1.xpose.msra.mxu0 0.0
        %372 = vmatprep.subr.mxu0 0.0
        %373 = vmatpush1.xpose.msra.mxu0 0.0
        %374 = vmatprep.subr.mxu0 0.0
        %375 = vmatpush1.xpose.msra.mxu0 0.0
        %376 = vmatprep.subr.mxu0 0.0
        %377 = vmatpush1.xpose.msra.mxu0 0.0
        %378 = vmatprep.subr.mxu0 0.0
        %379 = vmatpush1.xpose.msra.mxu0 0.0
        %380 = vmatprep.subr.mxu0 0.0
        %381 = vmatpush1.xpose.msra.mxu0 %v350
        %382 = vmatprep.subr.mxu0 0.0
        %383 = vmatpush1.xpose.msra.mxu0 %v348
        %384 = vmatprep.subr.mxu0 0.0
        %385 = vmatpush2.xpose.msra.mxu0 0.0
        %386 = vmatprep.subr.mxu0 0.0
        %387 = vmatpush2.xpose.msra.mxu0 0.0
        %388 = vmatprep.subr.mxu0 0.0
        %389 = vmatpush2.xpose.msra.mxu0 0.0
        %390 = vmatprep.subr.mxu0 0.0
        %391 = vmatpush2.xpose.msra.mxu0 0.0
        %392 = vmatprep.subr.mxu0 0.0
        %393 = vmatpush2.xpose.msra.mxu0 0.0
        %394 = vmatprep.subr.mxu0 0.0
        %395 = vmatpush2.xpose.msra.mxu0 0.0
        %396 = vmatprep.subr.mxu0 0.0
        %397 = vmatpush2.xpose.msra.mxu0 0.0
        %398 = vmatprep.subr.mxu0 0.0
        %399 = vmatpush2.xpose.msra.mxu0 0.0
        %400 = vmatprep.subr.mxu0 0.0
        %401 = vmatpush2.xpose.msra.mxu0 0.0
        %402 = vmatprep.subr.mxu0 0.0
        %403 = vmatpush2.xpose.msra.mxu0 0.0
        %404 = vmatprep.subr.mxu0 0.0
        %405 = vmatpush2.xpose.msra.mxu0 0.0
        %406 = vmatprep.subr.mxu0 0.0
        %407 = vmatpush2.xpose.msra.mxu0 0.0
        %408 = vmatprep.subr.mxu0 0.0
        %409 = vmatpush2.xpose.msra.mxu0 0.0
        %410 = vmatprep.subr.mxu0 0.0
        %411 = vmatpush2.xpose.msra.mxu0 0.0
        %412 = vmatprep.subr.mxu0 0.0
        %413 = vmatpush2.xpose.msra.mxu0 0.0
        %414 = vmatprep.subr.mxu0 0.0
        %415 = vmatpush2.xpose.msra.mxu0 0.0
        %416 = vmatprep.mubr.f32.mxu0 0.0
        %417 = vmatmul.mubr.f32.gmra.mxu0 %v343
        %v418 = vpop.f32.mrf.mxu0
        %v419 = vadd.f32 0.0, %v418
        %v420 = vpop.f32.mrf.mxu0
        %421 = vmatprep.mubr.f32.mxu0 0.0
        %422 = vmatmul.mubr.f32.gmra.mxu0 %v346
        %v423 = vpop.f32.mrf.mxu0
        %v424 = vadd.f32 0.0, %v423
        %v425 = vpop.f32.mrf.mxu0
        %426 = vdwg.mxu0
        %vm427 = vcmask 130048
        %v428 = vsel %vm427, %v419, -inf
        %429 = vmax.xlane.f32.xlu0 %v428
        %v430 = vpop.xlane.xlu0 %429
        %v431 = vsel %vm427, %v424, -inf
        %432 = vmax.xlane.f32.xlu0 %v431
        %v433 = vpop.xlane.xlu0 %432
        %v434 = vsub.f32 %v419, %v430
        %v435 = vsub.f32 %v424, %v433
        %v436 = vmul.f32 %v434, 1.442695
        %v437 = vpow.pop %v436
        %v438 = vmul.f32 %v435, 1.442695
        %v439 = vpow.pop %v438
        %v440 = vsel %vm427, %v437, 0.0
        %441 = vadd.xlane.f32.xlu0 %v440
        %v442 = vpop.xlane.xlu0 %441
        %v443 = vsel %vm427, %v439, 0.0
        %444 = vadd.xlane.f32.xlu0 %v443
        %v445 = vpop.xlane.xlu0 %444
        %v446 = vrcp.pop %v442
        %v447 = vrcp.pop %v445
        %v448 = vmul.f32 %v437, %v446
        %v449 = vmul.f32 %v439, %v447
        %450 = vrot.lane.b32.xlu0 %v325, 64
        %v451 = vpop.permute.xlu0 %450
        %452 = vrot.lane.b32.xlu0 %v330, 64
        %v453 = vpop.permute.xlu0 %452
        %v457 = vsel %vm427, %v448, 0
        %v460 = vsel %vm427, %v449, 0
        %462 = vmatprep.subr.mxu0 0.0
        %463 = vmatpush1.msra.mxu0 0.0
        %464 = vmatprep.subr.mxu0 0.0
        %465 = vmatpush1.msra.mxu0 0.0
        %466 = vmatprep.subr.mxu0 0.0
        %467 = vmatpush1.msra.mxu0 0.0
        %468 = vmatprep.subr.mxu0 0.0
        %469 = vmatpush1.msra.mxu0 0.0
        %470 = vmatprep.subr.mxu0 0.0
        %471 = vmatpush1.msra.mxu0 0.0
        %472 = vmatprep.subr.mxu0 0.0
        %473 = vmatpush1.msra.mxu0 0.0
        %474 = vmatprep.subr.mxu0 0.0
        %475 = vmatpush1.msra.mxu0 0.0
        %476 = vmatprep.subr.mxu0 0.0
        %477 = vmatpush1.msra.mxu0 0.0
        %478 = vmatprep.subr.mxu0 0.0
        %479 = vmatpush1.msra.mxu0 0.0
        %480 = vmatprep.subr.mxu0 0.0
        %481 = vmatpush1.msra.mxu0 0.0
        %482 = vmatprep.subr.mxu0 0.0
        %483 = vmatpush1.msra.mxu0 0.0
        %484 = vmatprep.subr.mxu0 0.0
        %485 = vmatpush1.msra.mxu0 0.0
        %486 = vmatprep.subr.mxu0 0.0
        %487 = vmatpush1.msra.mxu0 0.0
        %488 = vmatprep.subr.mxu0 0.0
        %489 = vmatpush1.msra.mxu0 0.0
        %490 = vmatprep.subr.mxu0 0.0
        %491 = vmatpush1.msra.mxu0 %v453
        %492 = vmatprep.subr.mxu0 0.0
        %493 = vmatpush1.msra.mxu0 %v451
        %494 = vmatprep.subr.mxu0 0.0
        %495 = vmatpush2.msra.mxu0 0.0
        %496 = vmatprep.subr.mxu0 0.0
        %497 = vmatpush2.msra.mxu0 0.0
        %498 = vmatprep.subr.mxu0 0.0
        %499 = vmatpush2.msra.mxu0 0.0
        %500 = vmatprep.subr.mxu0 0.0
        %501 = vmatpush2.msra.mxu0 0.0
        %502 = vmatprep.subr.mxu0 0.0
        %503 = vmatpush2.msra.mxu0 0.0
        %504 = vmatprep.subr.mxu0 0.0
        %505 = vmatpush2.msra.mxu0 0.0
        %506 = vmatprep.subr.mxu0 0.0
        %507 = vmatpush2.msra.mxu0 0.0
        %508 = vmatprep.subr.mxu0 0.0
        %509 = vmatpush2.msra.mxu0 0.0
        %510 = vmatprep.subr.mxu0 0.0
        %511 = vmatpush2.msra.mxu0 0.0
        %512 = vmatprep.subr.mxu0 0.0
        %513 = vmatpush2.msra.mxu0 0.0
        %514 = vmatprep.subr.mxu0 0.0
        %515 = vmatpush2.msra.mxu0 0.0
        %516 = vmatprep.subr.mxu0 0.0
        %517 = vmatpush2.msra.mxu0 0.0
        %518 = vmatprep.subr.mxu0 0.0
        %519 = vmatpush2.msra.mxu0 0.0
        %520 = vmatprep.subr.mxu0 0.0
        %521 = vmatpush2.msra.mxu0 0.0
        %522 = vmatprep.subr.mxu0 0.0
        %523 = vmatpush2.msra.mxu0 0.0
        %524 = vmatprep.subr.mxu0 0.0
        %525 = vmatpush2.msra.mxu0 0.0
        %526 = vmatprep.mubr.f32.mxu0 0.0
        %527 = vmatmul.mubr.f32.gmra.mxu0 %v457
        %v528 = vpop.f32.mrf.mxu0
        %v529 = vadd.f32 0.0, %v528
        %v530 = vpop.f32.mrf.mxu0
        %531 = vmatprep.mubr.f32.mxu0 0.0
        %532 = vmatmul.mubr.f32.gmra.mxu0 %v460
        %v533 = vpop.f32.mrf.mxu0
        %v534 = vadd.f32 0.0, %v533
        %v535 = vpop.f32.mrf.mxu0
        %536 = vdwg.mxu0
        %537 = vrot.lane.b32.xlu0 %v333, 120
        %v538 = vpop.permute.xlu0 %537
        %539 = vrot.lane.b32.xlu0 %v334, 120
        %v540 = vpop.permute.xlu0 %539
        %541 = vrot.lane.b32.xlu0 %v325, 88
        %v542 = vpop.permute.xlu0 %541
        %543 = vrot.lane.b32.xlu0 %v330, 88
        %v544 = vpop.permute.xlu0 %543
        %v545 = vsel %vm341, %v538, 0
        %v547 = vsel %vm341, %v540, 0
        %v549 = vsel %vm341, %v542, 0
        %v551 = vsel %vm341, %v544, 0
        %553 = vmatprep.subr.mxu0 0.0
        %554 = vmatpush1.xpose.msra.mxu0 0.0
        %555 = vmatprep.subr.mxu0 0.0
        %556 = vmatpush1.xpose.msra.mxu0 0.0
        %557 = vmatprep.subr.mxu0 0.0
        %558 = vmatpush1.xpose.msra.mxu0 0.0
        %559 = vmatprep.subr.mxu0 0.0
        %560 = vmatpush1.xpose.msra.mxu0 0.0
        %561 = vmatprep.subr.mxu0 0.0
        %562 = vmatpush1.xpose.msra.mxu0 0.0
        %563 = vmatprep.subr.mxu0 0.0
        %564 = vmatpush1.xpose.msra.mxu0 0.0
        %565 = vmatprep.subr.mxu0 0.0
        %566 = vmatpush1.xpose.msra.mxu0 0.0
        %567 = vmatprep.subr.mxu0 0.0
        %568 = vmatpush1.xpose.msra.mxu0 0.0
        %569 = vmatprep.subr.mxu0 0.0
        %570 = vmatpush1.xpose.msra.mxu0 0.0
        %571 = vmatprep.subr.mxu0 0.0
        %572 = vmatpush1.xpose.msra.mxu0 0.0
        %573 = vmatprep.subr.mxu0 0.0
        %574 = vmatpush1.xpose.msra.mxu0 0.0
        %575 = vmatprep.subr.mxu0 0.0
        %576 = vmatpush1.xpose.msra.mxu0 0.0
        %577 = vmatprep.subr.mxu0 0.0
        %578 = vmatpush1.xpose.msra.mxu0 0.0
        %579 = vmatprep.subr.mxu0 0.0
        %580 = vmatpush1.xpose.msra.mxu0 0.0
        %581 = vmatprep.subr.mxu0 0.0
        %582 = vmatpush1.xpose.msra.mxu0 %v551
        %583 = vmatprep.subr.mxu0 0.0
        %584 = vmatpush1.xpose.msra.mxu0 %v549
        %585 = vmatprep.subr.mxu0 0.0
        %586 = vmatpush2.xpose.msra.mxu0 0.0
        %587 = vmatprep.subr.mxu0 0.0
        %588 = vmatpush2.xpose.msra.mxu0 0.0
        %589 = vmatprep.subr.mxu0 0.0
        %590 = vmatpush2.xpose.msra.mxu0 0.0
        %591 = vmatprep.subr.mxu0 0.0
        %592 = vmatpush2.xpose.msra.mxu0 0.0
        %593 = vmatprep.subr.mxu0 0.0
        %594 = vmatpush2.xpose.msra.mxu0 0.0
        %595 = vmatprep.subr.mxu0 0.0
        %596 = vmatpush2.xpose.msra.mxu0 0.0
        %597 = vmatprep.subr.mxu0 0.0
        %598 = vmatpush2.xpose.msra.mxu0 0.0
        %599 = vmatprep.subr.mxu0 0.0
        %600 = vmatpush2.xpose.msra.mxu0 0.0
        %601 = vmatprep.subr.mxu0 0.0
        %602 = vmatpush2.xpose.msra.mxu0 0.0
        %603 = vmatprep.subr.mxu0 0.0
        %604 = vmatpush2.xpose.msra.mxu0 0.0
        %605 = vmatprep.subr.mxu0 0.0
        %606 = vmatpush2.xpose.msra.mxu0 0.0
        %607 = vmatprep.subr.mxu0 0.0
        %608 = vmatpush2.xpose.msra.mxu0 0.0
        %609 = vmatprep.subr.mxu0 0.0
        %610 = vmatpush2.xpose.msra.mxu0 0.0
        %611 = vmatprep.subr.mxu0 0.0
        %612 = vmatpush2.xpose.msra.mxu0 0.0
        %613 = vmatprep.subr.mxu0 0.0
        %614 = vmatpush2.xpose.msra.mxu0 0.0
        %615 = vmatprep.subr.mxu0 0.0
        %616 = vmatpush2.xpose.msra.mxu0 0.0
        %617 = vmatprep.mubr.f32.mxu0 0.0
        %618 = vmatmul.mubr.f32.gmra.mxu0 %v545
        %v619 = vpop.f32.mrf.mxu0
        %v620 = vadd.f32 0.0, %v619
        %v621 = vpop.f32.mrf.mxu0
        %622 = vmatprep.mubr.f32.mxu0 0.0
        %623 = vmatmul.mubr.f32.gmra.mxu0 %v547
        %v624 = vpop.f32.mrf.mxu0
        %v625 = vadd.f32 0.0, %v624
        %v626 = vpop.f32.mrf.mxu0
        %627 = vdwg.mxu0
        %v628 = vsel %vm427, %v620, -inf
        %629 = vmax.xlane.f32.xlu0 %v628
        %v630 = vpop.xlane.xlu0 %629
        %v631 = vsel %vm427, %v625, -inf
        %632 = vmax.xlane.f32.xlu0 %v631
        %v633 = vpop.xlane.xlu0 %632
        %v634 = vsub.f32 %v620, %v630
        %v635 = vsub.f32 %v625, %v633
        %v636 = vmul.f32 %v634, 1.442695
        %v637 = vpow.pop %v636
        %v638 = vmul.f32 %v635, 1.442695
        %v639 = vpow.pop %v638
        %v640 = vsel %vm427, %v637, 0.0
        %641 = vadd.xlane.f32.xlu0 %v640
        %v642 = vpop.xlane.xlu0 %641
        %v643 = vsel %vm427, %v639, 0.0
        %644 = vadd.xlane.f32.xlu0 %v643
        %v645 = vpop.xlane.xlu0 %644
        %v646 = vrcp.pop %v642
        %v647 = vrcp.pop %v645
        %v648 = vmul.f32 %v637, %v646
        %v649 = vmul.f32 %v639, %v647
        %650 = vrot.lane.b32.xlu0 %v325, 56
        %v651 = vpop.permute.xlu0 %650
        %652 = vrot.lane.b32.xlu0 %v330, 56
        %v653 = vpop.permute.xlu0 %652
        %v657 = vsel %vm427, %v648, 0
        %v660 = vsel %vm427, %v649, 0
        %662 = vmatprep.subr.mxu0 0.0
        %663 = vmatpush1.msra.mxu0 0.0
        %664 = vmatprep.subr.mxu0 0.0
        %665 = vmatpush1.msra.mxu0 0.0
        %666 = vmatprep.subr.mxu0 0.0
        %667 = vmatpush1.msra.mxu0 0.0
        %668 = vmatprep.subr.mxu0 0.0
        %669 = vmatpush1.msra.mxu0 0.0
        %670 = vmatprep.subr.mxu0 0.0
        %671 = vmatpush1.msra.mxu0 0.0
        %672 = vmatprep.subr.mxu0 0.0
        %673 = vmatpush1.msra.mxu0 0.0
        %674 = vmatprep.subr.mxu0 0.0
        %675 = vmatpush1.msra.mxu0 0.0
        %676 = vmatprep.subr.mxu0 0.0
        %677 = vmatpush1.msra.mxu0 0.0
        %678 = vmatprep.subr.mxu0 0.0
        %679 = vmatpush1.msra.mxu0 0.0
        %680 = vmatprep.subr.mxu0 0.0
        %681 = vmatpush1.msra.mxu0 0.0
        %682 = vmatprep.subr.mxu0 0.0
        %683 = vmatpush1.msra.mxu0 0.0
        %684 = vmatprep.subr.mxu0 0.0
        %685 = vmatpush1.msra.mxu0 0.0
        %686 = vmatprep.subr.mxu0 0.0
        %687 = vmatpush1.msra.mxu0 0.0
        %688 = vmatprep.subr.mxu0 0.0
        %689 = vmatpush1.msra.mxu0 0.0
        %690 = vmatprep.subr.mxu0 0.0
        %691 = vmatpush1.msra.mxu0 %v653
        %692 = vmatprep.subr.mxu0 0.0
        %693 = vmatpush1.msra.mxu0 %v651
        %694 = vmatprep.subr.mxu0 0.0
        %695 = vmatpush2.msra.mxu0 0.0
        %696 = vmatprep.subr.mxu0 0.0
        %697 = vmatpush2.msra.mxu0 0.0
        %698 = vmatprep.subr.mxu0 0.0
        %699 = vmatpush2.msra.mxu0 0.0
        %700 = vmatprep.subr.mxu0 0.0
        %701 = vmatpush2.msra.mxu0 0.0
        %702 = vmatprep.subr.mxu0 0.0
        %703 = vmatpush2.msra.mxu0 0.0
        %704 = vmatprep.subr.mxu0 0.0
        %705 = vmatpush2.msra.mxu0 0.0
        %706 = vmatprep.subr.mxu0 0.0
        %707 = vmatpush2.msra.mxu0 0.0
        %708 = vmatprep.subr.mxu0 0.0
        %709 = vmatpush2.msra.mxu0 0.0
        %710 = vmatprep.subr.mxu0 0.0
        %711 = vmatpush2.msra.mxu0 0.0
        %712 = vmatprep.subr.mxu0 0.0
        %713 = vmatpush2.msra.mxu0 0.0
        %714 = vmatprep.subr.mxu0 0.0
        %715 = vmatpush2.msra.mxu0 0.0
        %716 = vmatprep.subr.mxu0 0.0
        %717 = vmatpush2.msra.mxu0 0.0
        %718 = vmatprep.subr.mxu0 0.0
        %719 = vmatpush2.msra.mxu0 0.0
        %720 = vmatprep.subr.mxu0 0.0
        %721 = vmatpush2.msra.mxu0 0.0
        %722 = vmatprep.subr.mxu0 0.0
        %723 = vmatpush2.msra.mxu0 0.0
        %724 = vmatprep.subr.mxu0 0.0
        %725 = vmatpush2.msra.mxu0 0.0
        %726 = vmatprep.mubr.f32.mxu0 0.0
        %727 = vmatmul.mubr.f32.gmra.mxu0 %v657
        %v728 = vpop.f32.mrf.mxu0
        %v729 = vadd.f32 0.0, %v728
        %v730 = vpop.f32.mrf.mxu0
        %731 = vmatprep.mubr.f32.mxu0 0.0
        %732 = vmatmul.mubr.f32.gmra.mxu0 %v660
        %v733 = vpop.f32.mrf.mxu0
        %v734 = vadd.f32 0.0, %v733
        %v735 = vpop.f32.mrf.mxu0
        %736 = vdwg.mxu0
        %737 = vrot.lane.b32.xlu0 %v333, 112
        %v738 = vpop.permute.xlu0 %737
        %739 = vrot.lane.b32.xlu0 %v334, 112
        %v740 = vpop.permute.xlu0 %739
        %741 = vrot.lane.b32.xlu0 %v325, 80
        %v742 = vpop.permute.xlu0 %741
        %743 = vrot.lane.b32.xlu0 %v330, 80
        %v744 = vpop.permute.xlu0 %743
        %v745 = vsel %vm341, %v738, 0
        %v747 = vsel %vm341, %v740, 0
        %v749 = vsel %vm341, %v742, 0
        %v751 = vsel %vm341, %v744, 0
        %753 = vmatprep.subr.mxu0 0.0
        %754 = vmatpush1.xpose.msra.mxu0 0.0
        %755 = vmatprep.subr.mxu0 0.0
        %756 = vmatpush1.xpose.msra.mxu0 0.0
        %757 = vmatprep.subr.mxu0 0.0
        %758 = vmatpush1.xpose.msra.mxu0 0.0
        %759 = vmatprep.subr.mxu0 0.0
        %760 = vmatpush1.xpose.msra.mxu0 0.0
        %761 = vmatprep.subr.mxu0 0.0
        %762 = vmatpush1.xpose.msra.mxu0 0.0
        %763 = vmatprep.subr.mxu0 0.0
        %764 = vmatpush1.xpose.msra.mxu0 0.0
        %765 = vmatprep.subr.mxu0 0.0
        %766 = vmatpush1.xpose.msra.mxu0 0.0
        %767 = vmatprep.subr.mxu0 0.0
        %768 = vmatpush1.xpose.msra.mxu0 0.0
        %769 = vmatprep.subr.mxu0 0.0
        %770 = vmatpush1.xpose.msra.mxu0 0.0
        %771 = vmatprep.subr.mxu0 0.0
        %772 = vmatpush1.xpose.msra.mxu0 0.0
        %773 = vmatprep.subr.mxu0 0.0
        %774 = vmatpush1.xpose.msra.mxu0 0.0
        %775 = vmatprep.subr.mxu0 0.0
        %776 = vmatpush1.xpose.msra.mxu0 0.0
        %777 = vmatprep.subr.mxu0 0.0
        %778 = vmatpush1.xpose.msra.mxu0 0.0
        %779 = vmatprep.subr.mxu0 0.0
        %780 = vmatpush1.xpose.msra.mxu0 0.0
        %781 = vmatprep.subr.mxu0 0.0
        %782 = vmatpush1.xpose.msra.mxu0 %v751
        %783 = vmatprep.subr.mxu0 0.0
        %784 = vmatpush1.xpose.msra.mxu0 %v749
        %785 = vmatprep.subr.mxu0 0.0
        %786 = vmatpush2.xpose.msra.mxu0 0.0
        %787 = vmatprep.subr.mxu0 0.0
        %788 = vmatpush2.xpose.msra.mxu0 0.0
        %789 = vmatprep.subr.mxu0 0.0
        %790 = vmatpush2.xpose.msra.mxu0 0.0
        %791 = vmatprep.subr.mxu0 0.0
        %792 = vmatpush2.xpose.msra.mxu0 0.0
        %793 = vmatprep.subr.mxu0 0.0
        %794 = vmatpush2.xpose.msra.mxu0 0.0
        %795 = vmatprep.subr.mxu0 0.0
        %796 = vmatpush2.xpose.msra.mxu0 0.0
        %797 = vmatprep.subr.mxu0 0.0
        %798 = vmatpush2.xpose.msra.mxu0 0.0
        %799 = vmatprep.subr.mxu0 0.0
        %800 = vmatpush2.xpose.msra.mxu0 0.0
        %801 = vmatprep.subr.mxu0 0.0
        %802 = vmatpush2.xpose.msra.mxu0 0.0
        %803 = vmatprep.subr.mxu0 0.0
        %804 = vmatpush2.xpose.msra.mxu0 0.0
        %805 = vmatprep.subr.mxu0 0.0
        %806 = vmatpush2.xpose.msra.mxu0 0.0
        %807 = vmatprep.subr.mxu0 0.0
        %808 = vmatpush2.xpose.msra.mxu0 0.0
        %809 = vmatprep.subr.mxu0 0.0
        %810 = vmatpush2.xpose.msra.mxu0 0.0
        %811 = vmatprep.subr.mxu0 0.0
        %812 = vmatpush2.xpose.msra.mxu0 0.0
        %813 = vmatprep.subr.mxu0 0.0
        %814 = vmatpush2.xpose.msra.mxu0 0.0
        %815 = vmatprep.subr.mxu0 0.0
        %816 = vmatpush2.xpose.msra.mxu0 0.0
        %817 = vmatprep.mubr.f32.mxu0 0.0
        %818 = vmatmul.mubr.f32.gmra.mxu0 %v745
        %v819 = vpop.f32.mrf.mxu0
        %v820 = vadd.f32 0.0, %v819
        %v821 = vpop.f32.mrf.mxu0
        %822 = vmatprep.mubr.f32.mxu0 0.0
        %823 = vmatmul.mubr.f32.gmra.mxu0 %v747
        %v824 = vpop.f32.mrf.mxu0
        %v825 = vadd.f32 0.0, %v824
        %v826 = vpop.f32.mrf.mxu0
        %827 = vdwg.mxu0
        %v828 = vsel %vm427, %v820, -inf
        %829 = vmax.xlane.f32.xlu0 %v828
        %v830 = vpop.xlane.xlu0 %829
        %v831 = vsel %vm427, %v825, -inf
        %832 = vmax.xlane.f32.xlu0 %v831
        %v833 = vpop.xlane.xlu0 %832
        %v834 = vsub.f32 %v820, %v830
        %v835 = vsub.f32 %v825, %v833
        %v836 = vmul.f32 %v834, 1.442695
        %v837 = vpow.pop %v836
        %v838 = vmul.f32 %v835, 1.442695
        %v839 = vpow.pop %v838
        %v840 = vsel %vm427, %v837, 0.0
        %841 = vadd.xlane.f32.xlu0 %v840
        %v842 = vpop.xlane.xlu0 %841
        %v843 = vsel %vm427, %v839, 0.0
        %844 = vadd.xlane.f32.xlu0 %v843
        %v845 = vpop.xlane.xlu0 %844
        %v846 = vrcp.pop %v842
        %v847 = vrcp.pop %v845
        %v848 = vmul.f32 %v837, %v846
        %v849 = vmul.f32 %v839, %v847
        %850 = vrot.lane.b32.xlu0 %v325, 48
        %v851 = vpop.permute.xlu0 %850
        %852 = vrot.lane.b32.xlu0 %v330, 48
        %v853 = vpop.permute.xlu0 %852
        %v857 = vsel %vm427, %v848, 0
        %v860 = vsel %vm427, %v849, 0
        %862 = vmatprep.subr.mxu0 0.0
        %863 = vmatpush1.msra.mxu0 0.0
        %864 = vmatprep.subr.mxu0 0.0
        %865 = vmatpush1.msra.mxu0 0.0
        %866 = vmatprep.subr.mxu0 0.0
        %867 = vmatpush1.msra.mxu0 0.0
        %868 = vmatprep.subr.mxu0 0.0
        %869 = vmatpush1.msra.mxu0 0.0
        %870 = vmatprep.subr.mxu0 0.0
        %871 = vmatpush1.msra.mxu0 0.0
        %872 = vmatprep.subr.mxu0 0.0
        %873 = vmatpush1.msra.mxu0 0.0
        %874 = vmatprep.subr.mxu0 0.0
        %875 = vmatpush1.msra.mxu0 0.0
        %876 = vmatprep.subr.mxu0 0.0
        %877 = vmatpush1.msra.mxu0 0.0
        %878 = vmatprep.subr.mxu0 0.0
        %879 = vmatpush1.msra.mxu0 0.0
        %880 = vmatprep.subr.mxu0 0.0
        %881 = vmatpush1.msra.mxu0 0.0
        %882 = vmatprep.subr.mxu0 0.0
        %883 = vmatpush1.msra.mxu0 0.0
        %884 = vmatprep.subr.mxu0 0.0
        %885 = vmatpush1.msra.mxu0 0.0
        %886 = vmatprep.subr.mxu0 0.0
        %887 = vmatpush1.msra.mxu0 0.0
        %888 = vmatprep.subr.mxu0 0.0
        %889 = vmatpush1.msra.mxu0 0.0
        %890 = vmatprep.subr.mxu0 0.0
        %891 = vmatpush1.msra.mxu0 %v853
        %892 = vmatprep.subr.mxu0 0.0
        %893 = vmatpush1.msra.mxu0 %v851
        %894 = vmatprep.subr.mxu0 0.0
        %895 = vmatpush2.msra.mxu0 0.0
        %896 = vmatprep.subr.mxu0 0.0
        %897 = vmatpush2.msra.mxu0 0.0
        %898 = vmatprep.subr.mxu0 0.0
        %899 = vmatpush2.msra.mxu0 0.0
        %900 = vmatprep.subr.mxu0 0.0
        %901 = vmatpush2.msra.mxu0 0.0
        %902 = vmatprep.subr.mxu0 0.0
        %903 = vmatpush2.msra.mxu0 0.0
        %904 = vmatprep.subr.mxu0 0.0
        %905 = vmatpush2.msra.mxu0 0.0
        %906 = vmatprep.subr.mxu0 0.0
        %907 = vmatpush2.msra.mxu0 0.0
        %908 = vmatprep.subr.mxu0 0.0
        %909 = vmatpush2.msra.mxu0 0.0
        %910 = vmatprep.subr.mxu0 0.0
        %911 = vmatpush2.msra.mxu0 0.0
        %912 = vmatprep.subr.mxu0 0.0
        %913 = vmatpush2.msra.mxu0 0.0
        %914 = vmatprep.subr.mxu0 0.0
        %915 = vmatpush2.msra.mxu0 0.0
        %916 = vmatprep.subr.mxu0 0.0
        %917 = vmatpush2.msra.mxu0 0.0
        %918 = vmatprep.subr.mxu0 0.0
        %919 = vmatpush2.msra.mxu0 0.0
        %920 = vmatprep.subr.mxu0 0.0
        %921 = vmatpush2.msra.mxu0 0.0
        %922 = vmatprep.subr.mxu0 0.0
        %923 = vmatpush2.msra.mxu0 0.0
        %924 = vmatprep.subr.mxu0 0.0
        %925 = vmatpush2.msra.mxu0 0.0
        %926 = vmatprep.mubr.f32.mxu0 0.0
        %927 = vmatmul.mubr.f32.gmra.mxu0 %v857
        %v928 = vpop.f32.mrf.mxu0
        %v929 = vadd.f32 0.0, %v928
        %v930 = vpop.f32.mrf.mxu0
        %931 = vmatprep.mubr.f32.mxu0 0.0
        %932 = vmatmul.mubr.f32.gmra.mxu0 %v860
        %v933 = vpop.f32.mrf.mxu0
        %v934 = vadd.f32 0.0, %v933
        %v935 = vpop.f32.mrf.mxu0
        %936 = vdwg.mxu0
        %937 = vrot.lane.b32.xlu0 %v333, 104
        %v938 = vpop.permute.xlu0 %937
        %939 = vrot.lane.b32.xlu0 %v334, 104
        %v940 = vpop.permute.xlu0 %939
        %941 = vrot.lane.b32.xlu0 %v325, 72
        %v942 = vpop.permute.xlu0 %941
        %943 = vrot.lane.b32.xlu0 %v330, 72
        %v944 = vpop.permute.xlu0 %943
        %v945 = vsel %vm341, %v938, 0
        %v947 = vsel %vm341, %v940, 0
        %v949 = vsel %vm341, %v942, 0
        %v951 = vsel %vm341, %v944, 0
        %953 = vmatprep.subr.mxu0 0.0
        %954 = vmatpush1.xpose.msra.mxu0 0.0
        %955 = vmatprep.subr.mxu0 0.0
        %956 = vmatpush1.xpose.msra.mxu0 0.0
        %957 = vmatprep.subr.mxu0 0.0
        %958 = vmatpush1.xpose.msra.mxu0 0.0
        %959 = vmatprep.subr.mxu0 0.0
        %960 = vmatpush1.xpose.msra.mxu0 0.0
        %961 = vmatprep.subr.mxu0 0.0
        %962 = vmatpush1.xpose.msra.mxu0 0.0
        %963 = vmatprep.subr.mxu0 0.0
        %964 = vmatpush1.xpose.msra.mxu0 0.0
        %965 = vmatprep.subr.mxu0 0.0
        %966 = vmatpush1.xpose.msra.mxu0 0.0
        %967 = vmatprep.subr.mxu0 0.0
        %968 = vmatpush1.xpose.msra.mxu0 0.0
        %969 = vmatprep.subr.mxu0 0.0
        %970 = vmatpush1.xpose.msra.mxu0 0.0
        %971 = vmatprep.subr.mxu0 0.0
        %972 = vmatpush1.xpose.msra.mxu0 0.0
        %973 = vmatprep.subr.mxu0 0.0
        %974 = vmatpush1.xpose.msra.mxu0 0.0
        %975 = vmatprep.subr.mxu0 0.0
        %976 = vmatpush1.xpose.msra.mxu0 0.0
        %977 = vmatprep.subr.mxu0 0.0
        %978 = vmatpush1.xpose.msra.mxu0 0.0
        %979 = vmatprep.subr.mxu0 0.0
        %980 = vmatpush1.xpose.msra.mxu0 0.0
        %981 = vmatprep.subr.mxu0 0.0
        %982 = vmatpush1.xpose.msra.mxu0 %v951
        %983 = vmatprep.subr.mxu0 0.0
        %984 = vmatpush1.xpose.msra.mxu0 %v949
        %985 = vmatprep.subr.mxu0 0.0
        %986 = vmatpush2.xpose.msra.mxu0 0.0
        %987 = vmatprep.subr.mxu0 0.0
        %988 = vmatpush2.xpose.msra.mxu0 0.0
        %989 = vmatprep.subr.mxu0 0.0
        %990 = vmatpush2.xpose.msra.mxu0 0.0
        %991 = vmatprep.subr.mxu0 0.0
        %992 = vmatpush2.xpose.msra.mxu0 0.0
        %993 = vmatprep.subr.mxu0 0.0
        %994 = vmatpush2.xpose.msra.mxu0 0.0
        %995 = vmatprep.subr.mxu0 0.0
        %996 = vmatpush2.xpose.msra.mxu0 0.0
        %997 = vmatprep.subr.mxu0 0.0
        %998 = vmatpush2.xpose.msra.mxu0 0.0
        %999 = vmatprep.subr.mxu0 0.0
        %1000 = vmatpush2.xpose.msra.mxu0 0.0
        %1001 = vmatprep.subr.mxu0 0.0
        %1002 = vmatpush2.xpose.msra.mxu0 0.0
        %1003 = vmatprep.subr.mxu0 0.0
        %1004 = vmatpush2.xpose.msra.mxu0 0.0
        %1005 = vmatprep.subr.mxu0 0.0
        %1006 = vmatpush2.xpose.msra.mxu0 0.0
        %1007 = vmatprep.subr.mxu0 0.0
        %1008 = vmatpush2.xpose.msra.mxu0 0.0
        %1009 = vmatprep.subr.mxu0 0.0
        %1010 = vmatpush2.xpose.msra.mxu0 0.0
        %1011 = vmatprep.subr.mxu0 0.0
        %1012 = vmatpush2.xpose.msra.mxu0 0.0
        %1013 = vmatprep.subr.mxu0 0.0
        %1014 = vmatpush2.xpose.msra.mxu0 0.0
        %1015 = vmatprep.subr.mxu0 0.0
        %1016 = vmatpush2.xpose.msra.mxu0 0.0
        %1017 = vmatprep.mubr.f32.mxu0 0.0
        %1018 = vmatmul.mubr.f32.gmra.mxu0 %v945
        %v1019 = vpop.f32.mrf.mxu0
        %v1020 = vadd.f32 0.0, %v1019
        %v1021 = vpop.f32.mrf.mxu0
        %1022 = vmatprep.mubr.f32.mxu0 0.0
        %1023 = vmatmul.mubr.f32.gmra.mxu0 %v947
        %v1024 = vpop.f32.mrf.mxu0
        %v1025 = vadd.f32 0.0, %v1024
        %v1026 = vpop.f32.mrf.mxu0
        %1027 = vdwg.mxu0
        %v1028 = vsel %vm427, %v1020, -inf
        %1029 = vmax.xlane.f32.xlu0 %v1028
        %v1030 = vpop.xlane.xlu0 %1029
        %v1031 = vsel %vm427, %v1025, -inf
        %1032 = vmax.xlane.f32.xlu0 %v1031
        %v1033 = vpop.xlane.xlu0 %1032
        %v1034 = vsub.f32 %v1020, %v1030
        %v1035 = vsub.f32 %v1025, %v1033
        %v1036 = vmul.f32 %v1034, 1.442695
        %v1037 = vpow.pop %v1036
        %v1038 = vmul.f32 %v1035, 1.442695
        %v1039 = vpow.pop %v1038
        %v1040 = vsel %vm427, %v1037, 0.0
        %1041 = vadd.xlane.f32.xlu0 %v1040
        %v1042 = vpop.xlane.xlu0 %1041
        %v1043 = vsel %vm427, %v1039, 0.0
        %1044 = vadd.xlane.f32.xlu0 %v1043
        %v1045 = vpop.xlane.xlu0 %1044
        %v1046 = vrcp.pop %v1042
        %v1047 = vrcp.pop %v1045
        %v1048 = vmul.f32 %v1037, %v1046
        %v1049 = vmul.f32 %v1039, %v1047
        %1050 = vrot.lane.b32.xlu0 %v325, 40
        %v1051 = vpop.permute.xlu0 %1050
        %1052 = vrot.lane.b32.xlu0 %v330, 40
        %v1053 = vpop.permute.xlu0 %1052
        %v1057 = vsel %vm427, %v1048, 0
        %v1060 = vsel %vm427, %v1049, 0
        %1062 = vmatprep.subr.mxu0 0.0
        %1063 = vmatpush1.msra.mxu0 0.0
        %1064 = vmatprep.subr.mxu0 0.0
        %1065 = vmatpush1.msra.mxu0 0.0
        %1066 = vmatprep.subr.mxu0 0.0
        %1067 = vmatpush1.msra.mxu0 0.0
        %1068 = vmatprep.subr.mxu0 0.0
        %1069 = vmatpush1.msra.mxu0 0.0
        %1070 = vmatprep.subr.mxu0 0.0
        %1071 = vmatpush1.msra.mxu0 0.0
        %1072 = vmatprep.subr.mxu0 0.0
        %1073 = vmatpush1.msra.mxu0 0.0
        %1074 = vmatprep.subr.mxu0 0.0
        %1075 = vmatpush1.msra.mxu0 0.0
        %1076 = vmatprep.subr.mxu0 0.0
        %1077 = vmatpush1.msra.mxu0 0.0
        %1078 = vmatprep.subr.mxu0 0.0
        %1079 = vmatpush1.msra.mxu0 0.0
        %1080 = vmatprep.subr.mxu0 0.0
        %1081 = vmatpush1.msra.mxu0 0.0
        %1082 = vmatprep.subr.mxu0 0.0
        %1083 = vmatpush1.msra.mxu0 0.0
        %1084 = vmatprep.subr.mxu0 0.0
        %1085 = vmatpush1.msra.mxu0 0.0
        %1086 = vmatprep.subr.mxu0 0.0
        %1087 = vmatpush1.msra.mxu0 0.0
        %1088 = vmatprep.subr.mxu0 0.0
        %1089 = vmatpush1.msra.mxu0 0.0
        %1090 = vmatprep.subr.mxu0 0.0
        %1091 = vmatpush1.msra.mxu0 %v1053
        %1092 = vmatprep.subr.mxu0 0.0
        %1093 = vmatpush1.msra.mxu0 %v1051
        %1094 = vmatprep.subr.mxu0 0.0
        %1095 = vmatpush2.msra.mxu0 0.0
        %1096 = vmatprep.subr.mxu0 0.0
        %1097 = vmatpush2.msra.mxu0 0.0
        %1098 = vmatprep.subr.mxu0 0.0
        %1099 = vmatpush2.msra.mxu0 0.0
        %1100 = vmatprep.subr.mxu0 0.0
        %1101 = vmatpush2.msra.mxu0 0.0
        %1102 = vmatprep.subr.mxu0 0.0
        %1103 = vmatpush2.msra.mxu0 0.0
        %1104 = vmatprep.subr.mxu0 0.0
        %1105 = vmatpush2.msra.mxu0 0.0
        %1106 = vmatprep.subr.mxu0 0.0
        %1107 = vmatpush2.msra.mxu0 0.0
        %1108 = vmatprep.subr.mxu0 0.0
        %1109 = vmatpush2.msra.mxu0 0.0
        %1110 = vmatprep.subr.mxu0 0.0
        %1111 = vmatpush2.msra.mxu0 0.0
        %1112 = vmatprep.subr.mxu0 0.0
        %1113 = vmatpush2.msra.mxu0 0.0
        %1114 = vmatprep.subr.mxu0 0.0
        %1115 = vmatpush2.msra.mxu0 0.0
        %1116 = vmatprep.subr.mxu0 0.0
        %1117 = vmatpush2.msra.mxu0 0.0
        %1118 = vmatprep.subr.mxu0 0.0
        %1119 = vmatpush2.msra.mxu0 0.0
        %1120 = vmatprep.subr.mxu0 0.0
        %1121 = vmatpush2.msra.mxu0 0.0
        %1122 = vmatprep.subr.mxu0 0.0
        %1123 = vmatpush2.msra.mxu0 0.0
        %1124 = vmatprep.subr.mxu0 0.0
        %1125 = vmatpush2.msra.mxu0 0.0
        %1126 = vmatprep.mubr.f32.mxu0 0.0
        %1127 = vmatmul.mubr.f32.gmra.mxu0 %v1057
        %v1128 = vpop.f32.mrf.mxu0
        %v1129 = vadd.f32 0.0, %v1128
        %v1130 = vpop.f32.mrf.mxu0
        %1131 = vmatprep.mubr.f32.mxu0 0.0
        %1132 = vmatmul.mubr.f32.gmra.mxu0 %v1060
        %v1133 = vpop.f32.mrf.mxu0
        %v1134 = vadd.f32 0.0, %v1133
        %v1135 = vpop.f32.mrf.mxu0
        %1136 = vdwg.mxu0
        %1139 = vrot.lane.b32.xlu0 %v729, 8
        %v1140 = vpop.permute.xlu0 %1139
        %1141 = vrot.lane.b32.xlu0 %v734, 8
        %v1142 = vpop.permute.xlu0 %1141
        %1147 = vrot.lane.b32.xlu0 %v929, 16
        %v1148 = vpop.permute.xlu0 %1147
        %1149 = vrot.lane.b32.xlu0 %v934, 16
        %v1150 = vpop.permute.xlu0 %1149
        %1155 = vrot.lane.b32.xlu0 %v1129, 24
        %v1156 = vpop.permute.xlu0 %1155
        %1157 = vrot.lane.b32.xlu0 %v1134, 24
        %v1158 = vpop.permute.xlu0 %1157
        %v1161 = vsel %vm341, %v529, %v1140
        %v1162 = vsel %vm341, %v534, %v1142
        %v1163 = vsel %vm427, %v1161, %v1148
        %v1164 = vsel %vm427, %v1162, %v1150
        %vm1165 = vcmask 195584
        %v1166 = vsel %vm1165, %v1163, %v1156
        %v1167 = vsel %vm1165, %v1164, %v1158
        %v1168 = vld [vmem:[#allocation7] sm:$0xff]
        %v1169 = vld [vmem:[#allocation7 + $0x8] sm:$0xff]
        %v1170 = vld [vmem:[#allocation7 + $0x10] sm:$0xff]
        %v1171 = vld [vmem:[#allocation7 + $0x18] sm:$0xff]
        %v1172 = vld [vmem:[%s3] sm:$0x1]
        %v1174 = vlaneseq
        %v1175 = vshrl.u32 %v1174, 7
        %v1176 = vsub.s32 0, %v1175
        %v1177 = vrot.slane %v1172, %v1176
        %v1180 = vsel %vm251, %v1166, 0
        %v1183 = vsel %vm251, %v1167, 0
        %1185 = vmatprep.subr.mxu0 0.0
        %1186 = vmatpush1.msra.mxu0 0.0
        %1187 = vmatprep.subr.mxu0 0.0
        %1188 = vmatpush1.msra.mxu0 0.0
        %1189 = vmatprep.subr.mxu0 0.0
        %1190 = vmatpush1.msra.mxu0 0.0
        %1191 = vmatprep.subr.mxu0 0.0
        %1192 = vmatpush1.msra.mxu0 0.0
        %1193 = vmatprep.subr.mxu0 0.0
        %1194 = vmatpush1.msra.mxu0 0.0
        %1195 = vmatprep.subr.mxu0 0.0
        %1196 = vmatpush1.msra.mxu0 0.0
        %1197 = vmatprep.subr.mxu0 0.0
        %1198 = vmatpush1.msra.mxu0 0.0
        %1199 = vmatprep.subr.mxu0 0.0
        %1200 = vmatpush1.msra.mxu0 0.0
        %1201 = vmatprep.subr.mxu0 0.0
        %1202 = vmatpush1.msra.mxu0 0.0
        %1203 = vmatprep.subr.mxu0 0.0
        %1204 = vmatpush1.msra.mxu0 0.0
        %1205 = vmatprep.subr.mxu0 0.0
        %1206 = vmatpush1.msra.mxu0 0.0
        %1207 = vmatprep.subr.mxu0 0.0
        %1208 = vmatpush1.msra.mxu0 0.0
        %1209 = vmatprep.subr.mxu0 0.0
        %1210 = vmatpush1.msra.mxu0 %v1171
        %1211 = vmatprep.subr.mxu0 0.0
        %1212 = vmatpush1.msra.mxu0 %v1170
        %1213 = vmatprep.subr.mxu0 0.0
        %1214 = vmatpush1.msra.mxu0 %v1169
        %1215 = vmatprep.subr.mxu0 0.0
        %1216 = vmatpush1.msra.mxu0 %v1168
        %1217 = vmatprep.subr.mxu0 0.0
        %1218 = vmatpush2.msra.mxu0 0.0
        %1219 = vmatprep.subr.mxu0 0.0
        %1220 = vmatpush2.msra.mxu0 0.0
        %1221 = vmatprep.subr.mxu0 0.0
        %1222 = vmatpush2.msra.mxu0 0.0
        %1223 = vmatprep.subr.mxu0 0.0
        %1224 = vmatpush2.msra.mxu0 0.0
        %1225 = vmatprep.subr.mxu0 0.0
        %1226 = vmatpush2.msra.mxu0 0.0
        %1227 = vmatprep.subr.mxu0 0.0
        %1228 = vmatpush2.msra.mxu0 0.0
        %1229 = vmatprep.subr.mxu0 0.0
        %1230 = vmatpush2.msra.mxu0 0.0
        %1231 = vmatprep.subr.mxu0 0.0
        %1232 = vmatpush2.msra.mxu0 0.0
        %1233 = vmatprep.subr.mxu0 0.0
        %1234 = vmatpush2.msra.mxu0 0.0
        %1235 = vmatprep.subr.mxu0 0.0
        %1236 = vmatpush2.msra.mxu0 0.0
        %1237 = vmatprep.subr.mxu0 0.0
        %1238 = vmatpush2.msra.mxu0 0.0
        %1239 = vmatprep.subr.mxu0 0.0
        %1240 = vmatpush2.msra.mxu0 0.0
        %1241 = vmatprep.subr.mxu0 0.0
        %1242 = vmatpush2.msra.mxu0 0.0
        %1243 = vmatprep.subr.mxu0 0.0
        %1244 = vmatpush2.msra.mxu0 0.0
        %1245 = vmatprep.subr.mxu0 0.0
        %1246 = vmatpush2.msra.mxu0 0.0
        %1247 = vmatprep.subr.mxu0 0.0
        %1248 = vmatpush2.msra.mxu0 0.0
        %1249 = vmatprep.mubr.f32.mxu0 0.0
        %1250 = vmatmul.mubr.f32.gmra.mxu0 %v1180
        %v1251 = vpop.f32.mrf.mxu0
        %v1252 = vadd.f32 %v1177, %v1251
        %v1253 = vpop.f32.mrf.mxu0
        %1254 = vmatprep.mubr.f32.mxu0 0.0
        %1255 = vmatmul.mubr.f32.gmra.mxu0 %v1183
        %v1256 = vpop.f32.mrf.mxu0
        %v1257 = vadd.f32 %v1177, %v1256
        %v1258 = vpop.f32.mrf.mxu0
        %1259 = vdwg.mxu0
        %1260 = vst.msk [vmem:[%s244] sm:$0xff] %vm251, %v1252
        %1261 = vst.msk [vmem:[%s244 + $0x8] sm:$0xff] %vm251, %v1257
        %s1262 = sand.u32 %s119, 1
        %s1263 = scalar_lea.sflag [#allocation4], %s1262
        %s1264 = sand.u32 %s119, 1
        %s1265 = smul.addr %s1264, 16
        %s1266 = scalar_lea.vmem [#allocation8], %s1265
        // Predicated region
        $region49: #{tpu_custom_call.1} parent=35 // pred_check
          %p1267 = pneg %p129
        $region50: #{tpu_custom_call.1} parent=35 // pred_check_branch
          %1269 = sbr.rel (%p1267) target = $region52
        $region51: #{tpu_custom_call.1} parent=35 // pred_region
          %s1271 = ssub.s32 256, 256
          %1272 = vsyncadd %s1263, %s1271
          %s1273 = smul.addr %s22, 2
          %s1274 = smul.addr %s1273, 128
          %s1275 = scalar_lea.hbm %s4, %s1274
          %s1276 = sshll.u32 %s1266, 4
          %s1277 = int_to_ptr.vmem [resolvable:$true] %s1276
          %1282 = dma.vmem_to_hbm [thread:$0]  %s1277, 256, %s1275, %s1263, 128, 128, 8
        $region52: #{tpu_custom_call.1} parent=35 // pred_fallthru
          _
      $region36: #{tpu_custom_call.1} parent=5 // pred_fallthru
        _
      %p1283 = scmp.le.s32.totalorder 2, %s17
      // Predicated region
      $region53: #{tpu_custom_call.1} parent=5 // pred_check
        %p1284 = pneg %p1283
      $region54: #{tpu_custom_call.1} parent=5 // pred_check_branch
        %1286 = sbr.rel (%p1284) target = $region56
      $region55: #{tpu_custom_call.1} parent=5 // pred_region
        %s1287 = ssub.s32 %s17, 2
        // Predicated region
        $region57: #{tpu_custom_call.1} parent=55 // pred_check
          %p1288 = pneg %p135
        $region58: #{tpu_custom_call.1} parent=55 // pred_check_branch
          %1290 = sbr.rel (%p1288) target = $region60
        $region59: #{tpu_custom_call.1} parent=55 // pred_region
          %s1291 = sand.u32 %s120, 1
          %s1292 = scalar_lea.sflag [#allocation4], %s1291
          %s1293 = sand.u32 %s120, 1
          %s1294 = smul.addr %s1293, 16
          %s1295 = scalar_lea.vmem [#allocation8], %s1294
          %1296 = dma.done %s1292, 256
        $region60: #{tpu_custom_call.1} parent=55 // pred_fallthru
          _
      $region56: #{tpu_custom_call.1} parent=5 // pred_fallthru
        _
    $region6: #{tpu_custom_call.1} parent=1 // loop_footer
      %s21 = sadd.s32 1, %s17
    $region7: #{tpu_custom_call.1} parent=1 // loop_footer_branch
      %16 = sbr.rel target = $region3
    $region8: #{tpu_custom_call.1} parent=1 // loop_exit
      _
    %1297 = vsyncpa [#allocation3], 1
    %s1298 = scalar_lea.sflag [#allocation3], 1
    %1299 = vsyncpa %s1298, 1
    %1300 = vsyncpa [#allocation6], 1
    %1301 = vsyncpa [#allocation4], 1
    %s1302 = scalar_lea.sflag [#allocation4], 1
    %1303 = vsyncpa %s1302, 1

</llo_original>
